<compile_context>
chip_gen: v5e
topology: v5e:2x2
jax: 0.10.0
libtpu: 0.0.40
codegen_flags: <defaults>
</compile_context>

<pallas_src>
import jax
import jax.numpy as jnp
from jax.experimental import pallas as pl
from jax.experimental.pallas import tpu as pltpu

# ---- small, forward-consistent hyperparameters ----
B = 2                # batch
N = 16               # num_nodes
L = 4                # seq_len   (must equal num_features, see note above)
C = 4                # num_features == input_dim
E = 32               # d_model == embed_dim == node_dim == temp_dim_tid == temp_dim_diw
P = 8                # pred_len == output_len
NUM_LAYER = 2
TOD = 288            # time_of_day_size
DOW = 7              # day_of_week_size
POINTS_PER_HOUR = 12
C_IN = C * L         # in_channels of time_series_emb_layer (16)
H = 4 * E            # hidden_dim = embed + node + tid + diw (128)
P_PAD = H            # lane-dense padded output width (128)
M = B * N            # 32 rows -> single block, grid=(1,)
NW = 2 * NUM_LAYER + 1   # stacked 128x128 weights: (w1, w2) per layer + regression


def stid_kernel(tid_idx_ref, diw_idx_ref,            # scalar prefetch (SMEM)
                x_ref, w0_ref, w_ref, b_ref,
                node_ref, tid_ref, diw_ref,
                out_ref, emb_ref):
    # x_ref   : [M, C_IN]   bf16  flattened per-(b, n) conv input channels
    # w0_ref  : [C_IN, H]   bf16  time_series_emb weight (cols E..H are zero)
    # w_ref   : [NW, H, H]  bf16  [w1_0, w2_0, ..., w1_{L-1}, w2_{L-1}, w_reg(pad)]
    # b_ref   : [NW+1,1,H]  f32   [b_ts(pad), b1_0, b2_0, ..., b_reg(pad)]
    # node/tid/diw_ref      f32   embedding tables (kept in f32, no rounding)
    # out_ref : [M, P_PAD]  f32   prediction in the first P lanes (lane-dense)
    # emb_ref : [M, H]      f32   scratch: additive term (ts bias + embeddings)

    # ---- assemble the f32 additive term: [b_ts | node | tid | diw] per row ----
    emb_ref[...] = jnp.broadcast_to(b_ref[0], (M, H))   # b_ts in lanes 0..E, 0 after
    for b in range(B):                                   # tiny B -> unrolled
        r0, r1 = b * N, (b + 1) * N
        emb_ref[r0:r1, E:2 * E] = node_ref[...]
        t = tid_ref[pl.ds(tid_idx_ref[b], 1), :]         # [1, E] dynamic table row
        emb_ref[r0:r1, 2 * E:3 * E] = jnp.broadcast_to(t, (N, E))
        d = diw_ref[pl.ds(diw_idx_ref[b], 1), :]
        emb_ref[r0:r1, 3 * E:4 * E] = jnp.broadcast_to(d, (N, E))

    # ---- time_series_emb 1x1 conv (matmul) + f32 bias/embedding add ----
    h = jnp.dot(x_ref[...], w0_ref[...],
                preferred_element_type=jnp.float32) + emb_ref[...]

    # ---- encoder: residual MLP blocks fc2(relu(fc1(h))) + h (dropout = id) ----
    for l in range(NUM_LAYER):
        z = jnp.dot(h.astype(jnp.bfloat16), w_ref[2 * l],
                    preferred_element_type=jnp.float32) + b_ref[1 + 2 * l]
        z = jnp.maximum(z, 0.0)
        h = jnp.dot(z.astype(jnp.bfloat16), w_ref[2 * l + 1],
                    preferred_element_type=jnp.float32) + b_ref[2 + 2 * l] + h

    # ---- regression 1x1 conv, zero-padded to 128 output lanes (unmasked vst) ----
    out_ref[...] = jnp.dot(h.astype(jnp.bfloat16), w_ref[NW - 1],
                           preferred_element_type=jnp.float32) + b_ref[NW]


def prepare_params(params):
    """One-time parameter preprocessing (pad/stack/cast). Cache the result."""
    bf = lambda a: a.astype(jnp.bfloat16)
    w0 = jnp.zeros((C_IN, H), jnp.float32).at[:, :E].set(params["w_ts"])
    wr = jnp.zeros((H, P_PAD), jnp.float32).at[:, :P].set(params["w_reg"])
    w_stack = []
    for l in range(NUM_LAYER):
        w_stack += [params["w1"][l], params["w2"][l]]
    w_stack.append(wr)
    b0 = jnp.zeros((1, H), jnp.float32).at[:, :E].set(params["b_ts"])
    br = jnp.zeros((1, P_PAD), jnp.float32).at[:, :P].set(params["b_reg"])
    b_stack = [b0]
    for l in range(NUM_LAYER):
        b_stack += [params["b1"][l], params["b2"][l]]
    b_stack.append(br)
    return {
        "w0": bf(w0),
        "w": bf(jnp.stack(w_stack)),   # [NW, H, H]
        "b": jnp.stack(b_stack),       # [NW+1, 1, H]
        "node": params["node_emb"],
        "tid": params["tid_emb"],
        "diw": params["diw_emb"],
    }


def _glue(seqs, seqs_time):
    """Per-call tensor plumbing, faithful to the PyTorch forward."""
    # seqs [B, L, N, C] -> permute(0,3,2,1) -> [B, C, N, L]; [..., :input_dim]
    x = jnp.transpose(seqs, (0, 3, 2, 1))[..., :C]
    # transpose(1,2).view(B, N, -1) -> per-(b, n) conv channel vector, rows (b, n)
    x_flat = jnp.transpose(x, (0, 2, 1, 3)).reshape(M, C_IN)

    # time-of-day / day-of-week indices (same for all nodes within a batch item)
    hour = (seqs_time[:, -2, 0, -1] + 0.5) * 23.0                 # [B]
    minute = (seqs_time[:, -1, 0, -1] + 0.5) * 59.0
    tid_idx = ((hour * 60.0 + minute) / (60.0 / POINTS_PER_HOUR)).astype(jnp.int32)
    day = (seqs_time[:, 2, 0, -1] + 0.5) * 6.0
    diw_idx = day.astype(jnp.int32)
    return x_flat, tid_idx, diw_idx


@jax.jit
def stid_forward(seqs, seqs_time, prep):
    x_flat, tid_idx, diw_idx = _glue(seqs, seqs_time)
    x = x_flat.astype(jnp.bfloat16)

    def full(shape):
        nd = len(shape)
        return pl.BlockSpec(shape, lambda i, *_, nd=nd: (0,) * nd)

    out = pl.pallas_call(
        stid_kernel,
        out_shape=jax.ShapeDtypeStruct((M, P_PAD), jnp.float32),
        grid_spec=pltpu.PrefetchScalarGridSpec(
            num_scalar_prefetch=2,
            grid=(1,),  # whole problem in one step; M = 32 rows
            in_specs=[
                full((M, C_IN)),
                full((C_IN, H)),
                full((NW, H, H)),
                full((NW + 1, 1, H)),
                full((N, E)),
                full((TOD, E)),
                full((DOW, E)),
            ],
            out_specs=pl.BlockSpec((M, P_PAD), lambda i, *_: (0, 0)),
            scratch_shapes=[pltpu.VMEM((M, H), jnp.float32)],
        ),
        compiler_params=pltpu.CompilerParams(
            dimension_semantics=("arbitrary",)),
    )(tid_idx, diw_idx, x, prep["w0"], prep["w"], prep["b"],
      prep["node"], prep["tid"], prep["diw"])

    # prediction: [B, P, N, 1] -> permute(0,3,2,1) -> [B, 1, N, P]
    return out[:, :P].reshape(B, N, P)[:, None, :, :]


def stid_reference(seqs, seqs_time, params):
    """Pure-JAX f32 reference for correctness checking."""
    x_flat, tid_idx, diw_idx = _glue(seqs, seqs_time)
    ts = x_flat @ params["w_ts"] + params["b_ts"]                    # [M, E]
    node = jnp.tile(params["node_emb"], (B, 1))                      # [M, E]
    tid = jnp.repeat(params["tid_emb"][tid_idx], N, axis=0)          # [M, E]
    diw = jnp.repeat(params["diw_emb"][diw_idx], N, axis=0)          # [M, E]
    h = jnp.concatenate([ts, node, tid, diw], axis=-1)               # [M, H]
    for l in range(NUM_LAYER):
        z = jnp.maximum(h @ params["w1"][l] + params["b1"][l], 0.0)
        h = z @ params["w2"][l] + params["b2"][l] + h
    out = h @ params["w_reg"] + params["b_reg"]
    return out.reshape(B, N, P)[:, None, :, :]


def init_params(key):
    ks = jax.random.split(key, 11)
    u = lambda k, shape, s=0.1: s * jax.random.uniform(k, shape, jnp.float32, -1.0, 1.0)
    return {
        "node_emb": u(ks[0], (N, E)),
        "tid_emb": u(ks[1], (TOD, E)),
        "diw_emb": u(ks[2], (DOW, E)),
        # weights stored as [in, out] (transpose of PyTorch Conv2d 1x1 [out, in, 1, 1])
        "w_ts": u(ks[3], (C_IN, E)),
        "b_ts": u(ks[4], (1, E)),
        "w1": u(ks[5], (NUM_LAYER, H, H)),
        "b1": u(ks[6], (NUM_LAYER, 1, H)),
        "w2": u(ks[7], (NUM_LAYER, H, H)),
        "b2": u(ks[8], (NUM_LAYER, 1, H)),
        "w_reg": u(ks[9], (H, P)),
        "b_reg": u(ks[10], (1, P)),
    }


if __name__ == "__main__":
    key = jax.random.PRNGKey(0)
    kp, kx, kt = jax.random.split(key, 3)
    params = init_params(kp)
    prep = jax.block_until_ready(prepare_params(params))   # one-time, cached

    # history data [B, L, N, C]; time features [B, 5, 1, L] in [-0.5, 0.5]
    seqs = jax.random.normal(kx, (B, L, N, C), jnp.float32)
    seqs_time = jax.random.uniform(kt, (B, 5, 1, L), jnp.float32, -0.5, 0.5)

    pred = jax.block_until_ready(stid_forward(seqs, seqs_time, prep))
    ref = jax.block_until_ready(stid_reference(seqs, seqs_time, params))

    assert pred.shape == (B, 1, N, P), pred.shape
    # bf16 matmul operands (f32 accumulation, f32 biases/embeddings/elementwise)
    assert jnp.allclose(pred, ref, rtol=2e-2, atol=2e-2), float(jnp.abs(pred - ref).max())
    print("KERNEL_OK")
</pallas_src>

<mosaic_0001>
module attributes {stable_mosaic.version = 11 : i64} {
  func.func @stid_kernel(%arg0: i32, %arg1: memref<2xi32, #tpu.memory_space<smem>>, %arg2: memref<2xi32, #tpu.memory_space<smem>>, %arg3: memref<32x16xbf16, #tpu.memory_space<vmem>>, %arg4: memref<16x128xbf16, #tpu.memory_space<vmem>>, %arg5: memref<5x128x128xbf16, #tpu.memory_space<vmem>>, %arg6: memref<6x1x128xf32, #tpu.memory_space<vmem>>, %arg7: memref<16x32xf32, #tpu.memory_space<vmem>>, %arg8: memref<288x32xf32, #tpu.memory_space<vmem>>, %arg9: memref<7x32xf32, #tpu.memory_space<vmem>>, %arg10: memref<32x128xf32, #tpu.memory_space<vmem>>, %arg11: memref<32x128xf32, #tpu.memory_space<vmem>>) attributes {dimension_semantics = [#tpu.dimension_semantics<arbitrary>], iteration_bounds = array<i64: 1>, scalar_prefetch = 2 : i64, scratch_operands = 1 : i64, tpu.core_type = #tpu.core_type<tc>, window_params = [{pipeline_mode = #tpu.pipeline_mode<synchronous>, transform_indices = @transform_0, window_bounds = array<i64: 32, 16>}, {pipeline_mode = #tpu.pipeline_mode<synchronous>, transform_indices = @transform_1, window_bounds = array<i64: 16, 128>}, {pipeline_mode = #tpu.pipeline_mode<synchronous>, transform_indices = @transform_2, window_bounds = array<i64: 5, 128, 128>}, {pipeline_mode = #tpu.pipeline_mode<synchronous>, transform_indices = @transform_3, window_bounds = array<i64: 6, 1, 128>}, {pipeline_mode = #tpu.pipeline_mode<synchronous>, transform_indices = @transform_4, window_bounds = array<i64: 16, 32>}, {pipeline_mode = #tpu.pipeline_mode<synchronous>, transform_indices = @transform_5, window_bounds = array<i64: 288, 32>}, {pipeline_mode = #tpu.pipeline_mode<synchronous>, transform_indices = @transform_6, window_bounds = array<i64: 7, 32>}, {pipeline_mode = #tpu.pipeline_mode<synchronous>, transform_indices = @transform_7, window_bounds = array<i64: 32, 128>}]} {
    %c0 = arith.constant 0 : index
    %c0_0 = arith.constant 0 : index
    %c0_1 = arith.constant 0 : index
    %0 = vector.load %arg6[%c0, %c0_0, %c0_1] : memref<6x1x128xf32, #tpu.memory_space<vmem>>, vector<1x1x128xf32>
    %1 = vector.shape_cast %0 : vector<1x1x128xf32> to vector<1x128xf32>
    %2 = vector.shape_cast %1 : vector<1x128xf32> to vector<1x128xf32>
    %3 = vector.broadcast %2 : vector<1x128xf32> to vector<32x128xf32>
    %c0_2 = arith.constant 0 : index
    %c0_3 = arith.constant 0 : index
    %4 = vector.load %arg11[%c0_2, %c0_3] : memref<32x128xf32, #tpu.memory_space<vmem>>, vector<32x128xf32>
    tpu.vector_store %arg11[%c0_2, %c0_3], %3 {strides = array<i32>} : memref<32x128xf32, #tpu.memory_space<vmem>>, vector<32x128xf32>,
    %c0_4 = arith.constant 0 : index
    %c0_5 = arith.constant 0 : index
    %5 = vector.load %arg7[%c0_4, %c0_5] : memref<16x32xf32, #tpu.memory_space<vmem>>, vector<16x32xf32>
    %c0_6 = arith.constant 0 : index
    %c32 = arith.constant 32 : index
    %6 = vector.load %arg11[%c0_6, %c32] : memref<32x128xf32, #tpu.memory_space<vmem>>, vector<16x32xf32>
    tpu.vector_store %arg11[%c0_6, %c32], %5 {strides = array<i32>} : memref<32x128xf32, #tpu.memory_space<vmem>>, vector<16x32xf32>,
    %c0_7 = arith.constant 0 : index
    %7 = memref.load %arg1[%c0_7] : memref<2xi32, #tpu.memory_space<smem>>
    %8 = arith.index_cast %7 : i32 to index
    %c0_8 = arith.constant 0 : index
    %9 = vector.load %arg8[%8, %c0_8] : memref<288x32xf32, #tpu.memory_space<vmem>>, vector<1x32xf32>
    %10 = vector.shape_cast %9 : vector<1x32xf32> to vector<1x32xf32>
    %11 = vector.broadcast %10 : vector<1x32xf32> to vector<16x32xf32>
    %c0_9 = arith.constant 0 : index
    %c64 = arith.constant 64 : index
    %12 = vector.load %arg11[%c0_9, %c64] : memref<32x128xf32, #tpu.memory_space<vmem>>, vector<16x32xf32>
    tpu.vector_store %arg11[%c0_9, %c64], %11 {strides = array<i32>} : memref<32x128xf32, #tpu.memory_space<vmem>>, vector<16x32xf32>,
    %c0_10 = arith.constant 0 : index
    %13 = memref.load %arg2[%c0_10] : memref<2xi32, #tpu.memory_space<smem>>
    %14 = arith.index_cast %13 : i32 to index
    %c0_11 = arith.constant 0 : index
    %15 = vector.load %arg9[%14, %c0_11] : memref<7x32xf32, #tpu.memory_space<vmem>>, vector<1x32xf32>
    %16 = vector.shape_cast %15 : vector<1x32xf32> to vector<1x32xf32>
    %17 = vector.broadcast %16 : vector<1x32xf32> to vector<16x32xf32>
    %c0_12 = arith.constant 0 : index
    %c96 = arith.constant 96 : index
    %18 = vector.load %arg11[%c0_12, %c96] : memref<32x128xf32, #tpu.memory_space<vmem>>, vector<16x32xf32>
    tpu.vector_store %arg11[%c0_12, %c96], %17 {strides = array<i32>} : memref<32x128xf32, #tpu.memory_space<vmem>>, vector<16x32xf32>,
    %c0_13 = arith.constant 0 : index
    %c0_14 = arith.constant 0 : index
    %19 = vector.load %arg7[%c0_13, %c0_14] : memref<16x32xf32, #tpu.memory_space<vmem>>, vector<16x32xf32>
    %c16 = arith.constant 16 : index
    %c32_15 = arith.constant 32 : index
    %20 = vector.load %arg11[%c16, %c32_15] : memref<32x128xf32, #tpu.memory_space<vmem>>, vector<16x32xf32>
    tpu.vector_store %arg11[%c16, %c32_15], %19 {strides = array<i32>} : memref<32x128xf32, #tpu.memory_space<vmem>>, vector<16x32xf32>,
    %c1 = arith.constant 1 : index
    %21 = memref.load %arg1[%c1] : memref<2xi32, #tpu.memory_space<smem>>
    %22 = arith.index_cast %21 : i32 to index
    %c0_16 = arith.constant 0 : index
    %23 = vector.load %arg8[%22, %c0_16] : memref<288x32xf32, #tpu.memory_space<vmem>>, vector<1x32xf32>
    %24 = vector.shape_cast %23 : vector<1x32xf32> to vector<1x32xf32>
    %25 = vector.broadcast %24 : vector<1x32xf32> to vector<16x32xf32>
    %c16_17 = arith.constant 16 : index
    %c64_18 = arith.constant 64 : index
    %26 = vector.load %arg11[%c16_17, %c64_18] : memref<32x128xf32, #tpu.memory_space<vmem>>, vector<16x32xf32>
    tpu.vector_store %arg11[%c16_17, %c64_18], %25 {strides = array<i32>} : memref<32x128xf32, #tpu.memory_space<vmem>>, vector<16x32xf32>,
    %c1_19 = arith.constant 1 : index
    %27 = memref.load %arg2[%c1_19] : memref<2xi32, #tpu.memory_space<smem>>
    %28 = arith.index_cast %27 : i32 to index
    %c0_20 = arith.constant 0 : index
    %29 = vector.load %arg9[%28, %c0_20] : memref<7x32xf32, #tpu.memory_space<vmem>>, vector<1x32xf32>
    %30 = vector.shape_cast %29 : vector<1x32xf32> to vector<1x32xf32>
    %31 = vector.broadcast %30 : vector<1x32xf32> to vector<16x32xf32>
    %c16_21 = arith.constant 16 : index
    %c96_22 = arith.constant 96 : index
    %32 = vector.load %arg11[%c16_21, %c96_22] : memref<32x128xf32, #tpu.memory_space<vmem>>, vector<16x32xf32>
    tpu.vector_store %arg11[%c16_21, %c96_22], %31 {strides = array<i32>} : memref<32x128xf32, #tpu.memory_space<vmem>>, vector<16x32xf32>,
    %c0_23 = arith.constant 0 : index
    %c0_24 = arith.constant 0 : index
    %33 = vector.load %arg3[%c0_23, %c0_24] : memref<32x16xbf16, #tpu.memory_space<vmem>>, vector<32x16xbf16>
    %c0_25 = arith.constant 0 : index
    %c0_26 = arith.constant 0 : index
    %34 = vector.load %arg4[%c0_25, %c0_26] : memref<16x128xbf16, #tpu.memory_space<vmem>>, vector<16x128xbf16>
    %cst = arith.constant dense<0.000000e+00> : vector<32x128xf32>
    %35 = tpu.matmul %33, %34, %cst {dimension_numbers = #tpu.dot_dimension_numbers<[1], [0], [0], [1], [0, 0, 1, 1], [], []>} : vector<32x16xbf16>, vector<16x128xbf16>, vector<32x128xf32> -> vector<32x128xf32>
    %c0_27 = arith.constant 0 : index
    %c0_28 = arith.constant 0 : index
    %36 = vector.load %arg11[%c0_27, %c0_28] : memref<32x128xf32, #tpu.memory_space<vmem>>, vector<32x128xf32>
    %37 = arith.addf %35, %36 : vector<32x128xf32>
    %38 = arith.truncf %37 : vector<32x128xf32> to vector<32x128xbf16>
    %c0_29 = arith.constant 0 : index
    %c0_30 = arith.constant 0 : index
    %c0_31 = arith.constant 0 : index
    %39 = vector.load %arg5[%c0_29, %c0_30, %c0_31] : memref<5x128x128xbf16, #tpu.memory_space<vmem>>, vector<1x128x128xbf16>
    %40 = vector.shape_cast %39 : vector<1x128x128xbf16> to vector<128x128xbf16>
    %cst_32 = arith.constant dense<0.000000e+00> : vector<32x128xf32>
    %41 = tpu.matmul %38, %40, %cst_32 {dimension_numbers = #tpu.dot_dimension_numbers<[1], [0], [0], [1], [0, 0, 1, 1], [], []>} : vector<32x128xbf16>, vector<128x128xbf16>, vector<32x128xf32> -> vector<32x128xf32>
    %c1_33 = arith.constant 1 : index
    %c0_34 = arith.constant 0 : index
    %c0_35 = arith.constant 0 : index
    %42 = vector.load %arg6[%c1_33, %c0_34, %c0_35] : memref<6x1x128xf32, #tpu.memory_space<vmem>>, vector<1x1x128xf32>
    %43 = vector.shape_cast %42 : vector<1x1x128xf32> to vector<1x128xf32>
    %44 = vector.broadcast %43 : vector<1x128xf32> to vector<32x128xf32>
    %45 = arith.addf %41, %44 : vector<32x128xf32>
    %cst_36 = arith.constant 0.000000e+00 : f32
    %46 = vector.broadcast %cst_36 : f32 to vector<32x128xf32>
    %47 = arith.maximumf %45, %46 : vector<32x128xf32>
    %48 = arith.truncf %47 : vector<32x128xf32> to vector<32x128xbf16>
    %c1_37 = arith.constant 1 : index
    %c0_38 = arith.constant 0 : index
    %c0_39 = arith.constant 0 : index
    %49 = vector.load %arg5[%c1_37, %c0_38, %c0_39] : memref<5x128x128xbf16, #tpu.memory_space<vmem>>, vector<1x128x128xbf16>
    %50 = vector.shape_cast %49 : vector<1x128x128xbf16> to vector<128x128xbf16>
    %cst_40 = arith.constant dense<0.000000e+00> : vector<32x128xf32>
    %51 = tpu.matmul %48, %50, %cst_40 {dimension_numbers = #tpu.dot_dimension_numbers<[1], [0], [0], [1], [0, 0, 1, 1], [], []>} : vector<32x128xbf16>, vector<128x128xbf16>, vector<32x128xf32> -> vector<32x128xf32>
    %c2 = arith.constant 2 : index
    %c0_41 = arith.constant 0 : index
    %c0_42 = arith.constant 0 : index
    %52 = vector.load %arg6[%c2, %c0_41, %c0_42] : memref<6x1x128xf32, #tpu.memory_space<vmem>>, vector<1x1x128xf32>
    %53 = vector.shape_cast %52 : vector<1x1x128xf32> to vector<1x128xf32>
    %54 = vector.broadcast %53 : vector<1x128xf32> to vector<32x128xf32>
    %55 = arith.addf %51, %54 : vector<32x128xf32>
    %56 = arith.addf %55, %37 : vector<32x128xf32>
    %57 = arith.truncf %56 : vector<32x128xf32> to vector<32x128xbf16>
    %c2_43 = arith.constant 2 : index
    %c0_44 = arith.constant 0 : index
    %c0_45 = arith.constant 0 : index
    %58 = vector.load %arg5[%c2_43, %c0_44, %c0_45] : memref<5x128x128xbf16, #tpu.memory_space<vmem>>, vector<1x128x128xbf16>
    %59 = vector.shape_cast %58 : vector<1x128x128xbf16> to vector<128x128xbf16>
    %cst_46 = arith.constant dense<0.000000e+00> : vector<32x128xf32>
    %60 = tpu.matmul %57, %59, %cst_46 {dimension_numbers = #tpu.dot_dimension_numbers<[1], [0], [0], [1], [0, 0, 1, 1], [], []>} : vector<32x128xbf16>, vector<128x128xbf16>, vector<32x128xf32> -> vector<32x128xf32>
    %c3 = arith.constant 3 : index
    %c0_47 = arith.constant 0 : index
    %c0_48 = arith.constant 0 : index
    %61 = vector.load %arg6[%c3, %c0_47, %c0_48] : memref<6x1x128xf32, #tpu.memory_space<vmem>>, vector<1x1x128xf32>
    %62 = vector.shape_cast %61 : vector<1x1x128xf32> to vector<1x128xf32>
    %63 = vector.broadcast %62 : vector<1x128xf32> to vector<32x128xf32>
    %64 = arith.addf %60, %63 : vector<32x128xf32>
    %cst_49 = arith.constant 0.000000e+00 : f32
    %65 = vector.broadcast %cst_49 : f32 to vector<32x128xf32>
    %66 = arith.maximumf %64, %65 : vector<32x128xf32>
    %67 = arith.truncf %66 : vector<32x128xf32> to vector<32x128xbf16>
    %c3_50 = arith.constant 3 : index
    %c0_51 = arith.constant 0 : index
    %c0_52 = arith.constant 0 : index
    %68 = vector.load %arg5[%c3_50, %c0_51, %c0_52] : memref<5x128x128xbf16, #tpu.memory_space<vmem>>, vector<1x128x128xbf16>
    %69 = vector.shape_cast %68 : vector<1x128x128xbf16> to vector<128x128xbf16>
    %cst_53 = arith.constant dense<0.000000e+00> : vector<32x128xf32>
    %70 = tpu.matmul %67, %69, %cst_53 {dimension_numbers = #tpu.dot_dimension_numbers<[1], [0], [0], [1], [0, 0, 1, 1], [], []>} : vector<32x128xbf16>, vector<128x128xbf16>, vector<32x128xf32> -> vector<32x128xf32>
    %c4 = arith.constant 4 : index
    %c0_54 = arith.constant 0 : index
    %c0_55 = arith.constant 0 : index
    %71 = vector.load %arg6[%c4, %c0_54, %c0_55] : memref<6x1x128xf32, #tpu.memory_space<vmem>>, vector<1x1x128xf32>
    %72 = vector.shape_cast %71 : vector<1x1x128xf32> to vector<1x128xf32>
    %73 = vector.broadcast %72 : vector<1x128xf32> to vector<32x128xf32>
    %74 = arith.addf %70, %73 : vector<32x128xf32>
    %75 = arith.addf %74, %56 : vector<32x128xf32>
    %76 = arith.truncf %75 : vector<32x128xf32> to vector<32x128xbf16>
    %c4_56 = arith.constant 4 : index
    %c0_57 = arith.constant 0 : index
    %c0_58 = arith.constant 0 : index
    %77 = vector.load %arg5[%c4_56, %c0_57, %c0_58] : memref<5x128x128xbf16, #tpu.memory_space<vmem>>, vector<1x128x128xbf16>
    %78 = vector.shape_cast %77 : vector<1x128x128xbf16> to vector<128x128xbf16>
    %cst_59 = arith.constant dense<0.000000e+00> : vector<32x128xf32>
    %79 = tpu.matmul %76, %78, %cst_59 {dimension_numbers = #tpu.dot_dimension_numbers<[1], [0], [0], [1], [0, 0, 1, 1], [], []>} : vector<32x128xbf16>, vector<128x128xbf16>, vector<32x128xf32> -> vector<32x128xf32>
    %c5 = arith.constant 5 : index
    %c0_60 = arith.constant 0 : index
    %c0_61 = arith.constant 0 : index
    %80 = vector.load %arg6[%c5, %c0_60, %c0_61] : memref<6x1x128xf32, #tpu.memory_space<vmem>>, vector<1x1x128xf32>
    %81 = vector.shape_cast %80 : vector<1x1x128xf32> to vector<1x128xf32>
    %82 = vector.broadcast %81 : vector<1x128xf32> to vector<32x128xf32>
    %83 = arith.addf %79, %82 : vector<32x128xf32>
    %c0_62 = arith.constant 0 : index
    %c0_63 = arith.constant 0 : index
    %84 = vector.load %arg10[%c0_62, %c0_63] : memref<32x128xf32, #tpu.memory_space<vmem>>, vector<32x128xf32>
    tpu.vector_store %arg10[%c0_62, %c0_63], %83 {strides = array<i32>} : memref<32x128xf32, #tpu.memory_space<vmem>>, vector<32x128xf32>,
    return
  }
  func.func @transform_0(%arg0: i32, %arg1: memref<2xi32, #tpu.memory_space<smem>>, %arg2: memref<2xi32, #tpu.memory_space<smem>>) -> (i32, i32) {
    %c0_i32 = arith.constant 0 : i32
    %c0_i32_0 = arith.constant 0 : i32
    %c0_i32_1 = arith.constant 0 : i32
    return %c0_i32, %c0_i32_0 : i32, i32
  }
  func.func @transform_1(%arg0: i32, %arg1: memref<2xi32, #tpu.memory_space<smem>>, %arg2: memref<2xi32, #tpu.memory_space<smem>>) -> (i32, i32) {
    %c0_i32 = arith.constant 0 : i32
    %c0_i32_0 = arith.constant 0 : i32
    %c0_i32_1 = arith.constant 0 : i32
    return %c0_i32, %c0_i32_0 : i32, i32
  }
  func.func @transform_2(%arg0: i32, %arg1: memref<2xi32, #tpu.memory_space<smem>>, %arg2: memref<2xi32, #tpu.memory_space<smem>>) -> (i32, i32, i32) {
    %c0_i32 = arith.constant 0 : i32
    %c0_i32_0 = arith.constant 0 : i32
    %c0_i32_1 = arith.constant 0 : i32
    %c0_i32_2 = arith.constant 0 : i32
    return %c0_i32, %c0_i32_0, %c0_i32_1 : i32, i32, i32
  }
  func.func @transform_3(%arg0: i32, %arg1: memref<2xi32, #tpu.memory_space<smem>>, %arg2: memref<2xi32, #tpu.memory_space<smem>>) -> (i32, i32, i32) {
    %c0_i32 = arith.constant 0 : i32
    %c0_i32_0 = arith.constant 0 : i32
    %c0_i32_1 = arith.constant 0 : i32
    %c0_i32_2 = arith.constant 0 : i32
    return %c0_i32, %c0_i32_0, %c0_i32_1 : i32, i32, i32
  }
  func.func @transform_4(%arg0: i32, %arg1: memref<2xi32, #tpu.memory_space<smem>>, %arg2: memref<2xi32, #tpu.memory_space<smem>>) -> (i32, i32) {
    %c0_i32 = arith.constant 0 : i32
    %c0_i32_0 = arith.constant 0 : i32
    %c0_i32_1 = arith.constant 0 : i32
    return %c0_i32, %c0_i32_0 : i32, i32
  }
  func.func @transform_5(%arg0: i32, %arg1: memref<2xi32, #tpu.memory_space<smem>>, %arg2: memref<2xi32, #tpu.memory_space<smem>>) -> (i32, i32) {
    %c0_i32 = arith.constant 0 : i32
    %c0_i32_0 = arith.constant 0 : i32
    %c0_i32_1 = arith.constant 0 : i32
    return %c0_i32, %c0_i32_0 : i32, i32
  }
  func.func @transform_6(%arg0: i32, %arg1: memref<2xi32, #tpu.memory_space<smem>>, %arg2: memref<2xi32, #tpu.memory_space<smem>>) -> (i32, i32) {
    %c0_i32 = arith.constant 0 : i32
    %c0_i32_0 = arith.constant 0 : i32
    %c0_i32_1 = arith.constant 0 : i32
    return %c0_i32, %c0_i32_0 : i32, i32
  }
  func.func @transform_7(%arg0: i32, %arg1: memref<2xi32, #tpu.memory_space<smem>>, %arg2: memref<2xi32, #tpu.memory_space<smem>>) -> (i32, i32) {
    %c0_i32 = arith.constant 0 : i32
    %c0_i32_0 = arith.constant 0 : i32
    %c0_i32_1 = arith.constant 0 : i32
    return %c0_i32, %c0_i32_0 : i32, i32
  }
}

</mosaic_0001>

<llo_original>
// kernel: stid_forward.1
$region0: #{stid_forward.1}
  #allocation0 [shape = 'u32[]', space=smem, size = 0x4, offset = 0x4, fixed_abs, tag = 'smem constant byte address 0x4 - core index']
  #allocation1 [shape = 'u32[72,128]{1,0:T(1,128)}', space=vmem, size = 0x9000, scoped, tag = 'internal scratch']
  #allocation2 [shape = 'f32[32,128]{1,0:T(8,128)}', space=vmem, size = 0x4000, scoped, tag = 'scratch operand']
  #allocation3 [shape = 's32[1]{0}', space=sflag, size = 0x4, scoped, tag = 'scoped memory for stid_forward.1']
  #allocation4 [shape = 'u8[512]{0}', space=smem, size = 0x200, scoped, tag = 'prefetched SMEM operand 0']
  #allocation5 [shape = 'u8[512]{0}', space=smem, size = 0x200, scoped, tag = 'prefetched SMEM operand 1']
  %s0 = inlined_call_operand.vmem [shape: s32[2], index: 0, kind: input, shape index: {}]
  %s1 = inlined_call_operand.vmem [shape: s32[2], index: 1, kind: input, shape index: {}]
  %s2 = inlined_call_operand.vmem [shape: bf16[32,16], index: 2, kind: input, shape index: {}]
  %s3 = inlined_call_operand.vmem [shape: bf16[16,128], index: 3, kind: input, shape index: {}]
  %s4 = inlined_call_operand.vmem [shape: bf16[5,128,128], index: 4, kind: input, shape index: {}]
  %s5 = inlined_call_operand.vmem [shape: f32[6,1,128], index: 5, kind: input, shape index: {}]
  %s6 = inlined_call_operand.vmem [shape: f32[16,32], index: 6, kind: input, shape index: {}]
  %s7 = inlined_call_operand.vmem [shape: f32[288,32], index: 7, kind: input, shape index: {}]
  %s8 = inlined_call_operand.vmem [shape: f32[7,32], index: 8, kind: input, shape index: {}]
  %s9 = inlined_call_operand.vmem [shape: f32[32,128], index: 9, kind: output, shape index: {}]
  %s10 = sld [smem:[#allocation0]]
  $region38: #{stid_forward.1} parent=0
    _
  %s12 = ssub.s32 1, %s10
  %s13 = scalar_select 0, %s12, %s10
  %s15 = sshll.u32 %s0, 4
  %s16 = int_to_ptr.vmem [resolvable:$true] %s15
  %18 = dma.vmem_to_smem %s16, 16, [#allocation4], [#allocation3]
  %s20 = sshll.u32 %s1, 4
  %s21 = int_to_ptr.vmem [resolvable:$true] %s20
  %23 = dma.vmem_to_smem %s21, 16, [#allocation5], [#allocation3]
  %25 = dma.done [#allocation3], 32
  %26 = sfence
  // Predicated region
  $region2: #{stid_forward.1} parent=0 // pred_check
    _
  $region3: #{stid_forward.1} parent=0 // pred_check_branch
    %28 = sbr.rel (0) target = $region5
  $region4: #{stid_forward.1} parent=0 // pred_region
    _
  $region5: #{stid_forward.1} parent=0 // pred_fallthru
    _
  // Predicated region
  $region6: #{stid_forward.1} parent=0 // pred_check
    _
  $region7: #{stid_forward.1} parent=0 // pred_check_branch
    %30 = sbr.rel (0) target = $region9
  $region8: #{stid_forward.1} parent=0 // pred_region
    _
  $region9: #{stid_forward.1} parent=0 // pred_fallthru
    _
  // Predicated region
  $region10: #{stid_forward.1} parent=0 // pred_check
    _
  $region11: #{stid_forward.1} parent=0 // pred_check_branch
    %32 = sbr.rel (0) target = $region13
  $region12: #{stid_forward.1} parent=0 // pred_region
    _
  $region13: #{stid_forward.1} parent=0 // pred_fallthru
    _
  // Predicated region
  $region14: #{stid_forward.1} parent=0 // pred_check
    _
  $region15: #{stid_forward.1} parent=0 // pred_check_branch
    %34 = sbr.rel (0) target = $region17
  $region16: #{stid_forward.1} parent=0 // pred_region
    _
  $region17: #{stid_forward.1} parent=0 // pred_fallthru
    _
  // Predicated region
  $region18: #{stid_forward.1} parent=0 // pred_check
    _
  $region19: #{stid_forward.1} parent=0 // pred_check_branch
    %36 = sbr.rel (0) target = $region21
  $region20: #{stid_forward.1} parent=0 // pred_region
    _
  $region21: #{stid_forward.1} parent=0 // pred_fallthru
    _
  // Predicated region
  $region22: #{stid_forward.1} parent=0 // pred_check
    _
  $region23: #{stid_forward.1} parent=0 // pred_check_branch
    %38 = sbr.rel (0) target = $region25
  $region24: #{stid_forward.1} parent=0 // pred_region
    _
  $region25: #{stid_forward.1} parent=0 // pred_fallthru
    _
  // Predicated region
  $region26: #{stid_forward.1} parent=0 // pred_check
    _
  $region27: #{stid_forward.1} parent=0 // pred_check_branch
    %40 = sbr.rel (0) target = $region29
  $region28: #{stid_forward.1} parent=0 // pred_region
    _
  $region29: #{stid_forward.1} parent=0 // pred_fallthru
    _
  %v42 = vld [vmem:[%s5] sm:$0x1]
  %v44 = vperm.slane %v42, 0
  %46 = vst [vmem:[#allocation2] sm:$0xff] %v44
  %47 = vst [vmem:[#allocation2 + $0x8] sm:$0xff] %v44
  %48 = vst [vmem:[#allocation2 + $0x10] sm:$0xff] %v44
  %49 = vst [vmem:[#allocation2 + $0x18] sm:$0xff] %v44
  %v50 = vld [vmem:[%s6] sm:$0xff]
  %v51 = vld [vmem:[%s6 + $0x8] sm:$0xff]
  %54 = vrot.lane.b32.xlu0 %v50, 32
  %v55 = vpop.permute.xlu0 %54
  %56 = vrot.lane.b32.xlu0 %v51, 32
  %v57 = vpop.permute.xlu0 %56
  %vm60 = vcmask 523520
  %61 = vst.msk [vmem:[#allocation2] sm:$0xff] %vm60, %v55
  %62 = vst.msk [vmem:[#allocation2 + $0x8] sm:$0xff] %vm60, %v57
  %s63 = sld [smem:[#allocation4]]
  %s64 = scalar_lea.vmem %s7, %s63
  %v65 = vld [vmem:[%s64] sm:$0x1]
  %v66 = vperm.slane %v65, 0
  %68 = vrot.lane.b32.xlu0 %v66, 64
  %v69 = vpop.permute.xlu0 %68
  %vm71 = vcmask 785920
  %72 = vst.msk [vmem:[#allocation2] sm:$0xff] %vm71, %v69
  %73 = vst.msk [vmem:[#allocation2 + $0x8] sm:$0xff] %vm71, %v69
  %s74 = sld [smem:[#allocation5]]
  %s75 = scalar_lea.vmem %s8, %s74
  %v76 = vld [vmem:[%s75] sm:$0x1]
  %v77 = vperm.slane %v76, 0
  %79 = vrot.lane.b32.xlu0 %v77, 96
  %v80 = vpop.permute.xlu0 %79
  %vm82 = vcmask 1048320
  %83 = vst.msk [vmem:[#allocation2] sm:$0xff] %vm82, %v80
  %84 = vst.msk [vmem:[#allocation2 + $0x8] sm:$0xff] %vm82, %v80
  %v85 = vld [vmem:[%s6] sm:$0xff]
  %v86 = vld [vmem:[%s6 + $0x8] sm:$0xff]
  %89 = vrot.lane.b32.xlu0 %v85, 32
  %v90 = vpop.permute.xlu0 %89
  %91 = vrot.lane.b32.xlu0 %v86, 32
  %v92 = vpop.permute.xlu0 %91
  %95 = vst.msk [vmem:[#allocation2 + $0x10] sm:$0xff] %vm60, %v90
  %96 = vst.msk [vmem:[#allocation2 + $0x18] sm:$0xff] %vm60, %v92
  %s97 = sld [smem:[#allocation4 + $0x1]]
  %s98 = scalar_lea.vmem %s7, %s97
  %v99 = vld [vmem:[%s98] sm:$0x1]
  %v100 = vperm.slane %v99, 0
  %102 = vrot.lane.b32.xlu0 %v100, 64
  %v103 = vpop.permute.xlu0 %102
  %105 = vst.msk [vmem:[#allocation2 + $0x10] sm:$0xff] %vm71, %v103
  %106 = vst.msk [vmem:[#allocation2 + $0x18] sm:$0xff] %vm71, %v103
  %s107 = sld [smem:[#allocation5 + $0x1]]
  %s108 = scalar_lea.vmem %s8, %s107
  %v109 = vld [vmem:[%s108] sm:$0x1]
  %v110 = vperm.slane %v109, 0
  %112 = vrot.lane.b32.xlu0 %v110, 96
  %v113 = vpop.permute.xlu0 %112
  %115 = vst.msk [vmem:[#allocation2 + $0x10] sm:$0xff] %vm82, %v113
  %116 = vst.msk [vmem:[#allocation2 + $0x18] sm:$0xff] %vm82, %v113
  %v117 = vld [vmem:[%s2] sm:$0xf]
  %v118 = vld [vmem:[%s2 + $0x4] sm:$0xf]
  %v119 = vld [vmem:[%s2 + $0x8] sm:$0xf]
  %v120 = vld [vmem:[%s2 + $0xc] sm:$0xf]
  %v121 = vld [vmem:[%s3] sm:$0xf]
  %v122 = vld [vmem:[%s3 + $0x4] sm:$0xf]
  %v123 = vld [vmem:[#allocation2] sm:$0xff]
  %v124 = vld [vmem:[#allocation2 + $0x8] sm:$0xff]
  %v125 = vld [vmem:[#allocation2 + $0x10] sm:$0xff]
  %v126 = vld [vmem:[#allocation2 + $0x18] sm:$0xff]
  %v131 = vunpack.c.l.b16 %v117
  %v132 = vunpack.c.l.b16 %v118
  %v133 = vunpack.c.l.b16 %v119
  %v134 = vunpack.c.l.b16 %v120
  %v135 = vpack.c.b16 %v132, %v131
  %v136 = vpack.c.b16 %v134, %v133
  %v139 = vunpack.c.l.b16 %v121
  %v140 = vunpack.c.l.b16 %v122
  %v141 = vpack.c.b16 %v140, %v139
  %vm143 = vcmask 130048
  %v145 = vsel %vm143, %v135, 0
  %v148 = vsel %vm143, %v136, 0
  %150 = vmatpush.bf16.msra.mxu0 0
  %151 = vmatpush.bf16.msra.mxu0 0
  %152 = vmatpush.bf16.msra.mxu0 0
  %153 = vmatpush.bf16.msra.mxu0 0
  %154 = vmatpush.bf16.msra.mxu0 0
  %155 = vmatpush.bf16.msra.mxu0 0
  %156 = vmatpush.bf16.msra.mxu0 0
  %157 = vmatpush.bf16.msra.mxu0 %v141
  %158 = vmatmul.bf16.gmra.mxu0 %v145
  %v159 = vpop.f32.mrf.mxu0
  %v160 = vadd.f32 %v123, %v159
  %v161 = vpop.f32.mrf.mxu0
  %v162 = vadd.f32 %v124, %v161
  %163 = vmatmul.bf16.gmra.mxu0 %v148
  %v164 = vpop.f32.mrf.mxu0
  %v165 = vadd.f32 %v125, %v164
  %v166 = vpop.f32.mrf.mxu0
  %v167 = vadd.f32 %v126, %v166
  %168 = vdwg.mxu0
  %v169 = vpack.c.bf16 %v162, %v160
  %v170 = vpack.c.bf16 %v167, %v165
  %v171 = vld [vmem:[%s4] sm:$0xf]
  %v172 = vld [vmem:[%s4 + $0x4] sm:$0xf]
  %v173 = vld [vmem:[%s4 + $0x8] sm:$0xf]
  %v174 = vld [vmem:[%s4 + $0xc] sm:$0xf]
  %v175 = vld [vmem:[%s4 + $0x10] sm:$0xf]
  %v176 = vld [vmem:[%s4 + $0x14] sm:$0xf]
  %v177 = vld [vmem:[%s4 + $0x18] sm:$0xf]
  %v178 = vld [vmem:[%s4 + $0x1c] sm:$0xf]
  %v179 = vld [vmem:[%s4 + $0x20] sm:$0xf]
  %v180 = vld [vmem:[%s4 + $0x24] sm:$0xf]
  %v181 = vld [vmem:[%s4 + $0x28] sm:$0xf]
  %v182 = vld [vmem:[%s4 + $0x2c] sm:$0xf]
  %v183 = vld [vmem:[%s4 + $0x30] sm:$0xf]
  %v184 = vld [vmem:[%s4 + $0x34] sm:$0xf]
  %v185 = vld [vmem:[%s4 + $0x38] sm:$0xf]
  %v186 = vld [vmem:[%s4 + $0x3c] sm:$0xf]
  %s187 = scalar_lea.vmem %s5, 1
  %v188 = vld [vmem:[%s187] sm:$0x1]
  %v190 = vperm.slane %v188, 0
  %v208 = vunpack.c.l.b16 %v171
  %v209 = vunpack.c.l.b16 %v172
  %v210 = vunpack.c.l.b16 %v173
  %v211 = vunpack.c.l.b16 %v174
  %v212 = vunpack.c.l.b16 %v175
  %v213 = vunpack.c.l.b16 %v176
  %v214 = vunpack.c.l.b16 %v177
  %v215 = vunpack.c.l.b16 %v178
  %v216 = vunpack.c.l.b16 %v179
  %v217 = vunpack.c.l.b16 %v180
  %v218 = vunpack.c.l.b16 %v181
  %v219 = vunpack.c.l.b16 %v182
  %v220 = vunpack.c.l.b16 %v183
  %v221 = vunpack.c.l.b16 %v184
  %v222 = vunpack.c.l.b16 %v185
  %v223 = vunpack.c.l.b16 %v186
  %v224 = vpack.c.b16 %v209, %v208
  %v225 = vpack.c.b16 %v211, %v210
  %v226 = vpack.c.b16 %v213, %v212
  %v227 = vpack.c.b16 %v215, %v214
  %v228 = vpack.c.b16 %v217, %v216
  %v229 = vpack.c.b16 %v219, %v218
  %v230 = vpack.c.b16 %v221, %v220
  %v231 = vpack.c.b16 %v223, %v222
  %240 = vmatpush.bf16.msra.mxu0 %v231
  %241 = vmatpush.bf16.msra.mxu0 %v230
  %242 = vmatpush.bf16.msra.mxu0 %v229
  %243 = vmatpush.bf16.msra.mxu0 %v228
  %244 = vmatpush.bf16.msra.mxu0 %v227
  %245 = vmatpush.bf16.msra.mxu0 %v226
  %246 = vmatpush.bf16.msra.mxu0 %v225
  %247 = vmatpush.bf16.msra.mxu0 %v224
  %248 = vmatmul.bf16.gmra.mxu0 %v169
  %v249 = vpop.f32.mrf.mxu0
  %v250 = vadd.f32 %v190, %v249
  %v251 = vpop.f32.mrf.mxu0
  %v252 = vadd.f32 %v190, %v251
  %253 = vmatmul.bf16.gmra.mxu0 %v170
  %v254 = vpop.f32.mrf.mxu0
  %v255 = vadd.f32 %v190, %v254
  %v256 = vpop.f32.mrf.mxu0
  %v257 = vadd.f32 %v190, %v256
  %258 = vdwg.mxu0
  %v259 = vmax.f32 %v250, 0.0
  %v260 = vmax.f32 %v252, 0.0
  %v261 = vmax.f32 %v255, 0.0
  %v262 = vmax.f32 %v257, 0.0
  %v263 = vpack.c.bf16 %v260, %v259
  %v264 = vpack.c.bf16 %v262, %v261
  %s265 = scalar_lea.vmem %s4, 64
  %v266 = vld [vmem:[%s265] sm:$0xf]
  %v267 = vld [vmem:[%s265 + $0x4] sm:$0xf]
  %v268 = vld [vmem:[%s265 + $0x8] sm:$0xf]
  %v269 = vld [vmem:[%s265 + $0xc] sm:$0xf]
  %v270 = vld [vmem:[%s265 + $0x10] sm:$0xf]
  %v271 = vld [vmem:[%s265 + $0x14] sm:$0xf]
  %v272 = vld [vmem:[%s265 + $0x18] sm:$0xf]
  %v273 = vld [vmem:[%s265 + $0x1c] sm:$0xf]
  %v274 = vld [vmem:[%s265 + $0x20] sm:$0xf]
  %v275 = vld [vmem:[%s265 + $0x24] sm:$0xf]
  %v276 = vld [vmem:[%s265 + $0x28] sm:$0xf]
  %v277 = vld [vmem:[%s265 + $0x2c] sm:$0xf]
  %v278 = vld [vmem:[%s265 + $0x30] sm:$0xf]
  %v279 = vld [vmem:[%s265 + $0x34] sm:$0xf]
  %v280 = vld [vmem:[%s265 + $0x38] sm:$0xf]
  %v281 = vld [vmem:[%s265 + $0x3c] sm:$0xf]
  %s282 = scalar_lea.vmem %s5, 2
  %v283 = vld [vmem:[%s282] sm:$0x1]
  %v285 = vperm.slane %v283, 0
  %v303 = vunpack.c.l.b16 %v266
  %v304 = vunpack.c.l.b16 %v267
  %v305 = vunpack.c.l.b16 %v268
  %v306 = vunpack.c.l.b16 %v269
  %v307 = vunpack.c.l.b16 %v270
  %v308 = vunpack.c.l.b16 %v271
  %v309 = vunpack.c.l.b16 %v272
  %v310 = vunpack.c.l.b16 %v273
  %v311 = vunpack.c.l.b16 %v274
  %v312 = vunpack.c.l.b16 %v275
  %v313 = vunpack.c.l.b16 %v276
  %v314 = vunpack.c.l.b16 %v277
  %v315 = vunpack.c.l.b16 %v278
  %v316 = vunpack.c.l.b16 %v279
  %v317 = vunpack.c.l.b16 %v280
  %v318 = vunpack.c.l.b16 %v281
  %v319 = vpack.c.b16 %v304, %v303
  %v320 = vpack.c.b16 %v306, %v305
  %v321 = vpack.c.b16 %v308, %v307
  %v322 = vpack.c.b16 %v310, %v309
  %v323 = vpack.c.b16 %v312, %v311
  %v324 = vpack.c.b16 %v314, %v313
  %v325 = vpack.c.b16 %v316, %v315
  %v326 = vpack.c.b16 %v318, %v317
  %335 = vmatpush.bf16.msra.mxu0 %v326
  %336 = vmatpush.bf16.msra.mxu0 %v325
  %337 = vmatpush.bf16.msra.mxu0 %v324
  %338 = vmatpush.bf16.msra.mxu0 %v323
  %339 = vmatpush.bf16.msra.mxu0 %v322
  %340 = vmatpush.bf16.msra.mxu0 %v321
  %341 = vmatpush.bf16.msra.mxu0 %v320
  %342 = vmatpush.bf16.msra.mxu0 %v319
  %343 = vmatmul.bf16.gmra.mxu0 %v263
  %v344 = vpop.f32.mrf.mxu0
  %v345 = vadd.f32 %v285, %v344
  %v346 = vpop.f32.mrf.mxu0
  %v347 = vadd.f32 %v285, %v346
  %348 = vmatmul.bf16.gmra.mxu0 %v264
  %v349 = vpop.f32.mrf.mxu0
  %v350 = vadd.f32 %v285, %v349
  %v351 = vpop.f32.mrf.mxu0
  %v352 = vadd.f32 %v285, %v351
  %353 = vdwg.mxu0
  %v354 = vadd.f32 %v345, %v160
  %v355 = vadd.f32 %v347, %v162
  %v356 = vadd.f32 %v350, %v165
  %v357 = vadd.f32 %v352, %v167
  %v358 = vpack.c.bf16 %v355, %v354
  %v359 = vpack.c.bf16 %v357, %v356
  %s360 = scalar_lea.vmem %s4, 128
  %v361 = vld [vmem:[%s360] sm:$0xf]
  %v362 = vld [vmem:[%s360 + $0x4] sm:$0xf]
  %v363 = vld [vmem:[%s360 + $0x8] sm:$0xf]
  %v364 = vld [vmem:[%s360 + $0xc] sm:$0xf]
  %v365 = vld [vmem:[%s360 + $0x10] sm:$0xf]
  %v366 = vld [vmem:[%s360 + $0x14] sm:$0xf]
  %v367 = vld [vmem:[%s360 + $0x18] sm:$0xf]
  %v368 = vld [vmem:[%s360 + $0x1c] sm:$0xf]
  %v369 = vld [vmem:[%s360 + $0x20] sm:$0xf]
  %v370 = vld [vmem:[%s360 + $0x24] sm:$0xf]
  %v371 = vld [vmem:[%s360 + $0x28] sm:$0xf]
  %v372 = vld [vmem:[%s360 + $0x2c] sm:$0xf]
  %v373 = vld [vmem:[%s360 + $0x30] sm:$0xf]
  %v374 = vld [vmem:[%s360 + $0x34] sm:$0xf]
  %v375 = vld [vmem:[%s360 + $0x38] sm:$0xf]
  %v376 = vld [vmem:[%s360 + $0x3c] sm:$0xf]
  %s377 = scalar_lea.vmem %s5, 3
  %v378 = vld [vmem:[%s377] sm:$0x1]
  %v380 = vperm.slane %v378, 0
  %v398 = vunpack.c.l.b16 %v361
  %v399 = vunpack.c.l.b16 %v362
  %v400 = vunpack.c.l.b16 %v363
  %v401 = vunpack.c.l.b16 %v364
  %v402 = vunpack.c.l.b16 %v365
  %v403 = vunpack.c.l.b16 %v366
  %v404 = vunpack.c.l.b16 %v367
  %v405 = vunpack.c.l.b16 %v368
  %v406 = vunpack.c.l.b16 %v369
  %v407 = vunpack.c.l.b16 %v370
  %v408 = vunpack.c.l.b16 %v371
  %v409 = vunpack.c.l.b16 %v372
  %v410 = vunpack.c.l.b16 %v373
  %v411 = vunpack.c.l.b16 %v374
  %v412 = vunpack.c.l.b16 %v375
  %v413 = vunpack.c.l.b16 %v376
  %v414 = vpack.c.b16 %v399, %v398
  %v415 = vpack.c.b16 %v401, %v400
  %v416 = vpack.c.b16 %v403, %v402
  %v417 = vpack.c.b16 %v405, %v404
  %v418 = vpack.c.b16 %v407, %v406
  %v419 = vpack.c.b16 %v409, %v408
  %v420 = vpack.c.b16 %v411, %v410
  %v421 = vpack.c.b16 %v413, %v412
  %430 = vmatpush.bf16.msra.mxu0 %v421
  %431 = vmatpush.bf16.msra.mxu0 %v420
  %432 = vmatpush.bf16.msra.mxu0 %v419
  %433 = vmatpush.bf16.msra.mxu0 %v418
  %434 = vmatpush.bf16.msra.mxu0 %v417
  %435 = vmatpush.bf16.msra.mxu0 %v416
  %436 = vmatpush.bf16.msra.mxu0 %v415
  %437 = vmatpush.bf16.msra.mxu0 %v414
  %438 = vmatmul.bf16.gmra.mxu0 %v358
  %v439 = vpop.f32.mrf.mxu0
  %v440 = vadd.f32 %v380, %v439
  %v441 = vpop.f32.mrf.mxu0
  %v442 = vadd.f32 %v380, %v441
  %443 = vmatmul.bf16.gmra.mxu0 %v359
  %v444 = vpop.f32.mrf.mxu0
  %v445 = vadd.f32 %v380, %v444
  %v446 = vpop.f32.mrf.mxu0
  %v447 = vadd.f32 %v380, %v446
  %448 = vdwg.mxu0
  %v449 = vmax.f32 %v440, 0.0
  %v450 = vmax.f32 %v442, 0.0
  %v451 = vmax.f32 %v445, 0.0
  %v452 = vmax.f32 %v447, 0.0
  %v453 = vpack.c.bf16 %v450, %v449
  %v454 = vpack.c.bf16 %v452, %v451
  %s455 = scalar_lea.vmem %s4, 192
  %v456 = vld [vmem:[%s455] sm:$0xf]
  %v457 = vld [vmem:[%s455 + $0x4] sm:$0xf]
  %v458 = vld [vmem:[%s455 + $0x8] sm:$0xf]
  %v459 = vld [vmem:[%s455 + $0xc] sm:$0xf]
  %v460 = vld [vmem:[%s455 + $0x10] sm:$0xf]
  %v461 = vld [vmem:[%s455 + $0x14] sm:$0xf]
  %v462 = vld [vmem:[%s455 + $0x18] sm:$0xf]
  %v463 = vld [vmem:[%s455 + $0x1c] sm:$0xf]
  %v464 = vld [vmem:[%s455 + $0x20] sm:$0xf]
  %v465 = vld [vmem:[%s455 + $0x24] sm:$0xf]
  %v466 = vld [vmem:[%s455 + $0x28] sm:$0xf]
  %v467 = vld [vmem:[%s455 + $0x2c] sm:$0xf]
  %v468 = vld [vmem:[%s455 + $0x30] sm:$0xf]
  %v469 = vld [vmem:[%s455 + $0x34] sm:$0xf]
  %v470 = vld [vmem:[%s455 + $0x38] sm:$0xf]
  %v471 = vld [vmem:[%s455 + $0x3c] sm:$0xf]
  %s472 = scalar_lea.vmem %s5, 4
  %v473 = vld [vmem:[%s472] sm:$0x1]
  %v475 = vperm.slane %v473, 0
  %v493 = vunpack.c.l.b16 %v456
  %v494 = vunpack.c.l.b16 %v457
  %v495 = vunpack.c.l.b16 %v458
  %v496 = vunpack.c.l.b16 %v459
  %v497 = vunpack.c.l.b16 %v460
  %v498 = vunpack.c.l.b16 %v461
  %v499 = vunpack.c.l.b16 %v462
  %v500 = vunpack.c.l.b16 %v463
  %v501 = vunpack.c.l.b16 %v464
  %v502 = vunpack.c.l.b16 %v465
  %v503 = vunpack.c.l.b16 %v466
  %v504 = vunpack.c.l.b16 %v467
  %v505 = vunpack.c.l.b16 %v468
  %v506 = vunpack.c.l.b16 %v469
  %v507 = vunpack.c.l.b16 %v470
  %v508 = vunpack.c.l.b16 %v471
  %v509 = vpack.c.b16 %v494, %v493
  %v510 = vpack.c.b16 %v496, %v495
  %v511 = vpack.c.b16 %v498, %v497
  %v512 = vpack.c.b16 %v500, %v499
  %v513 = vpack.c.b16 %v502, %v501
  %v514 = vpack.c.b16 %v504, %v503
  %v515 = vpack.c.b16 %v506, %v505
  %v516 = vpack.c.b16 %v508, %v507
  %525 = vmatpush.bf16.msra.mxu0 %v516
  %526 = vmatpush.bf16.msra.mxu0 %v515
  %527 = vmatpush.bf16.msra.mxu0 %v514
  %528 = vmatpush.bf16.msra.mxu0 %v513
  %529 = vmatpush.bf16.msra.mxu0 %v512
  %530 = vmatpush.bf16.msra.mxu0 %v511
  %531 = vmatpush.bf16.msra.mxu0 %v510
  %532 = vmatpush.bf16.msra.mxu0 %v509
  %533 = vmatmul.bf16.gmra.mxu0 %v453
  %v534 = vpop.f32.mrf.mxu0
  %v535 = vadd.f32 %v475, %v534
  %v536 = vpop.f32.mrf.mxu0
  %v537 = vadd.f32 %v475, %v536
  %538 = vmatmul.bf16.gmra.mxu0 %v454
  %v539 = vpop.f32.mrf.mxu0
  %v540 = vadd.f32 %v475, %v539
  %v541 = vpop.f32.mrf.mxu0
  %v542 = vadd.f32 %v475, %v541
  %543 = vdwg.mxu0
  %v544 = vadd.f32 %v535, %v354
  %v545 = vadd.f32 %v537, %v355
  %v546 = vadd.f32 %v540, %v356
  %v547 = vadd.f32 %v542, %v357
  %v548 = vpack.c.bf16 %v545, %v544
  %v549 = vpack.c.bf16 %v547, %v546
  %s550 = scalar_lea.vmem %s4, 256
  %v551 = vld [vmem:[%s550] sm:$0xf]
  %v552 = vld [vmem:[%s550 + $0x4] sm:$0xf]
  %v553 = vld [vmem:[%s550 + $0x8] sm:$0xf]
  %v554 = vld [vmem:[%s550 + $0xc] sm:$0xf]
  %v555 = vld [vmem:[%s550 + $0x10] sm:$0xf]
  %v556 = vld [vmem:[%s550 + $0x14] sm:$0xf]
  %v557 = vld [vmem:[%s550 + $0x18] sm:$0xf]
  %v558 = vld [vmem:[%s550 + $0x1c] sm:$0xf]
  %v559 = vld [vmem:[%s550 + $0x20] sm:$0xf]
  %v560 = vld [vmem:[%s550 + $0x24] sm:$0xf]
  %v561 = vld [vmem:[%s550 + $0x28] sm:$0xf]
  %v562 = vld [vmem:[%s550 + $0x2c] sm:$0xf]
  %v563 = vld [vmem:[%s550 + $0x30] sm:$0xf]
  %v564 = vld [vmem:[%s550 + $0x34] sm:$0xf]
  %v565 = vld [vmem:[%s550 + $0x38] sm:$0xf]
  %v566 = vld [vmem:[%s550 + $0x3c] sm:$0xf]
  %s567 = scalar_lea.vmem %s5, 5
  %v568 = vld [vmem:[%s567] sm:$0x1]
  %v570 = vperm.slane %v568, 0
  %v588 = vunpack.c.l.b16 %v551
  %v589 = vunpack.c.l.b16 %v552
  %v590 = vunpack.c.l.b16 %v553
  %v591 = vunpack.c.l.b16 %v554
  %v592 = vunpack.c.l.b16 %v555
  %v593 = vunpack.c.l.b16 %v556
  %v594 = vunpack.c.l.b16 %v557
  %v595 = vunpack.c.l.b16 %v558
  %v596 = vunpack.c.l.b16 %v559
  %v597 = vunpack.c.l.b16 %v560
  %v598 = vunpack.c.l.b16 %v561
  %v599 = vunpack.c.l.b16 %v562
  %v600 = vunpack.c.l.b16 %v563
  %v601 = vunpack.c.l.b16 %v564
  %v602 = vunpack.c.l.b16 %v565
  %v603 = vunpack.c.l.b16 %v566
  %v604 = vpack.c.b16 %v589, %v588
  %v605 = vpack.c.b16 %v591, %v590
  %v606 = vpack.c.b16 %v593, %v592
  %v607 = vpack.c.b16 %v595, %v594
  %v608 = vpack.c.b16 %v597, %v596
  %v609 = vpack.c.b16 %v599, %v598
  %v610 = vpack.c.b16 %v601, %v600
  %v611 = vpack.c.b16 %v603, %v602
  %620 = vmatpush.bf16.msra.mxu0 %v611
  %621 = vmatpush.bf16.msra.mxu0 %v610
  %622 = vmatpush.bf16.msra.mxu0 %v609
  %623 = vmatpush.bf16.msra.mxu0 %v608
  %624 = vmatpush.bf16.msra.mxu0 %v607
  %625 = vmatpush.bf16.msra.mxu0 %v606
  %626 = vmatpush.bf16.msra.mxu0 %v605
  %627 = vmatpush.bf16.msra.mxu0 %v604
  %628 = vmatmul.bf16.gmra.mxu0 %v548
  %v629 = vpop.f32.mrf.mxu0
  %v630 = vadd.f32 %v570, %v629
  %v631 = vpop.f32.mrf.mxu0
  %v632 = vadd.f32 %v570, %v631
  %633 = vmatmul.bf16.gmra.mxu0 %v549
  %v634 = vpop.f32.mrf.mxu0
  %v635 = vadd.f32 %v570, %v634
  %v636 = vpop.f32.mrf.mxu0
  %v637 = vadd.f32 %v570, %v636
  %638 = vdwg.mxu0
  %639 = vst [vmem:[%s9] sm:$0xff] %v630
  %640 = vst [vmem:[%s9 + $0x8] sm:$0xff] %v632
  %641 = vst [vmem:[%s9 + $0x10] sm:$0xff] %v635
  %642 = vst [vmem:[%s9 + $0x18] sm:$0xff] %v637
  // Predicated region
  $region30: #{stid_forward.1} parent=0 // pred_check
    _
  $region31: #{stid_forward.1} parent=0 // pred_check_branch
    %644 = sbr.rel (0) target = $region33
  $region32: #{stid_forward.1} parent=0 // pred_region
    _
  $region33: #{stid_forward.1} parent=0 // pred_fallthru
    _
  // Predicated region
  $region34: #{stid_forward.1} parent=0 // pred_check
    _
  $region35: #{stid_forward.1} parent=0 // pred_check_branch
    %646 = sbr.rel (0) target = $region37
  $region36: #{stid_forward.1} parent=0 // pred_region
    _
  $region37: #{stid_forward.1} parent=0 // pred_fallthru
    _

</llo_original>
